<compile_context>
chip_gen: v7x
topology: tpu7x:2x2x1
jax: 0.10.0
libtpu: 0.0.40
codegen_flags: <defaults>
</compile_context>

<pallas_src>
import functools
import math

import jax
import jax.numpy as jnp
from jax.experimental import pallas as pl
from jax.experimental.pallas import tpu as pltpu

HIDDEN = 1024
OUT = 3
OUT_PAD = 128          # lane-dense padded output width
TB_MAX = 1024          # max batch tile (f32 hidden tile = 4 MiB, v7x-safe)


def _round_up(x, m):
    return ((x + m - 1) // m) * m


def _mlp_kernel(x_ref, w1_ref, b1_ref, w2_ref, b2_ref, o_ref):
    # x_ref : (TB, IN)        bf16
    # w1_ref: (IN, 1024)      bf16   (VMEM-resident across batch tiles)
    # b1_ref: (1, 1024)       f32
    # w2_ref: (1024, 128)     bf16   (zero-padded cols 3..127)
    # b2_ref: (1, 128)        f32    (zero-padded cols 3..127)
    # o_ref : (TB, 128)       f32    (lane-dense; sliced to 3 outside)
    x = x_ref[...]
    h = jnp.dot(x, w1_ref[...], preferred_element_type=jnp.float32)   # (TB,1024) f32
    h = jnp.maximum(h + b1_ref[...], 0.0)                             # f32 VPU
    y = jnp.dot(h.astype(jnp.bfloat16), w2_ref[...],
                preferred_element_type=jnp.float32)                   # (TB,128) f32
    o_ref[...] = (y + b2_ref[...]).astype(o_ref.dtype)


@jax.jit
def deep_q_forward(x, w1, b1, w2, b2):
    """Pallas forward pass of DeepQNetwork.fcn.

    x : (B, inputs) float32
    w1: (inputs, 1024), b1: (1024,)
    w2: (1024, 3),      b2: (3,)
    returns (B, 3) float32
    """
    B, IN = x.shape

    # Batch tiling: pad B up to a multiple of the tile so blocks divide evenly.
    TB = min(TB_MAX, _round_up(max(B, 1), 8))
    B_pad = _round_up(B, TB)
    grid = (B_pad // TB,)

    # bf16 matmul operands (f32 accumulate inside the kernel).
    x_p = jnp.zeros((B_pad, IN), jnp.bfloat16).at[:B].set(x.astype(jnp.bfloat16))
    w1_bf = w1.astype(jnp.bfloat16)
    b1_2d = b1.reshape(1, HIDDEN).astype(jnp.float32)

    # Lane-dense second layer: zero-pad 3 -> 128 output columns.
    w2_pad = jnp.zeros((HIDDEN, OUT_PAD), jnp.bfloat16).at[:, :OUT].set(
        w2.astype(jnp.bfloat16))
    b2_pad = jnp.zeros((1, OUT_PAD), jnp.float32).at[:, :OUT].set(
        b2.reshape(1, OUT).astype(jnp.float32))

    cost = pl.CostEstimate(
        flops=2 * B_pad * IN * HIDDEN + 2 * B_pad * HIDDEN * OUT_PAD,
        transcendentals=0,
        bytes_accessed=(x_p.size * 2 + w1_bf.size * 2 + b1_2d.size * 4
                        + w2_pad.size * 2 + b2_pad.size * 4
                        + B_pad * OUT_PAD * 4),
    )

    out = pl.pallas_call(
        _mlp_kernel,
        out_shape=jax.ShapeDtypeStruct((B_pad, OUT_PAD), jnp.float32),
        grid_spec=pltpu.PrefetchScalarGridSpec(
            num_scalar_prefetch=0,
            grid=grid,
            in_specs=[
                pl.BlockSpec((TB, IN), lambda i: (i, 0)),          # x tile
                pl.BlockSpec((IN, HIDDEN), lambda i: (0, 0)),      # w1 resident
                pl.BlockSpec((1, HIDDEN), lambda i: (0, 0)),       # b1 resident
                pl.BlockSpec((HIDDEN, OUT_PAD), lambda i: (0, 0)), # w2 resident
                pl.BlockSpec((1, OUT_PAD), lambda i: (0, 0)),      # b2 resident
            ],
            out_specs=pl.BlockSpec((TB, OUT_PAD), lambda i: (i, 0)),
        ),
        compiler_params=pltpu.CompilerParams(
            dimension_semantics=("parallel",),
            vmem_limit_bytes=32 * 1024 * 1024,
        ),
        cost_estimate=cost,
    )(x_p, w1_bf, b1_2d, w2_pad, b2_pad)

    # Slice off batch padding and the lane padding before any argmax/loss.
    return out[:B, :OUT]


def init_params(key, inputs):
    """Deterministic init mimicking PyTorch nn.Linear default
    (uniform in +/- 1/sqrt(fan_in))."""
    k1, k2, k3, k4 = jax.random.split(key, 4)
    bound1 = 1.0 / math.sqrt(inputs)
    bound2 = 1.0 / math.sqrt(HIDDEN)
    w1 = jax.random.uniform(k1, (inputs, HIDDEN), jnp.float32, -bound1, bound1)
    b1 = jax.random.uniform(k2, (HIDDEN,), jnp.float32, -bound1, bound1)
    w2 = jax.random.uniform(k3, (HIDDEN, OUT), jnp.float32, -bound2, bound2)
    b2 = jax.random.uniform(k4, (OUT,), jnp.float32, -bound2, bound2)
    return w1, b1, w2, b2


if __name__ == "__main__":
    # The DQN in this repo is the classic snake agent: 11 state indicators,
    # 3 actions. Use a small batch.
    B, INPUTS = 8, 11
    key = jax.random.PRNGKey(0)
    kx, kp = jax.random.split(key)
    x = jax.random.normal(kx, (B, INPUTS), jnp.float32)
    w1, b1, w2, b2 = init_params(kp, INPUTS)

    out = deep_q_forward(x, w1, b1, w2, b2)
    out = jax.block_until_ready(out)
    assert out.shape == (B, OUT)

    # Reference with identical bf16-operand / f32-accumulate math (tight check).
    h_ref = jnp.maximum(
        jnp.dot(x.astype(jnp.bfloat16), w1.astype(jnp.bfloat16),
                preferred_element_type=jnp.float32) + b1, 0.0)
    ref_bf16 = jnp.dot(h_ref.astype(jnp.bfloat16), w2.astype(jnp.bfloat16),
                       preferred_element_type=jnp.float32) + b2
    assert jnp.allclose(out, ref_bf16, atol=1e-5, rtol=1e-5)

    # Sanity check against the pure-f32 PyTorch-equivalent math (loose, bf16 error).
    ref_f32 = jnp.maximum(x @ w1 + b1, 0.0) @ w2 + b2
    assert jnp.allclose(out, ref_f32, atol=5e-2, rtol=5e-2)

    # TODO(synk): training step (DeepQTrainer: Adam update + MSE loss backward)
    # is host-side optimizer logic, not part of the forward kernel.
    print("KERNEL_OK")
</pallas_src>

<mosaic_0001>
module attributes {stable_mosaic.version = 11 : i64} {
  func.func @_mlp_kernel(%arg0: i32, %arg1: memref<8x11xbf16, #tpu.memory_space<vmem>>, %arg2: memref<11x1024xbf16, #tpu.memory_space<vmem>>, %arg3: memref<1x1024xf32, #tpu.memory_space<vmem>>, %arg4: memref<1024x128xbf16, #tpu.memory_space<vmem>>, %arg5: memref<1x128xf32, #tpu.memory_space<vmem>>, %arg6: memref<8x128xf32, #tpu.memory_space<vmem>>) attributes {dimension_semantics = [#tpu.dimension_semantics<parallel>], iteration_bounds = array<i64: 1>, scalar_prefetch = 0 : i64, scratch_operands = 0 : i64, tpu.core_type = #tpu.core_type<tc>, window_params = [{transform_indices = @transform_0, window_bounds = array<i64: 8, 11>}, {pipeline_mode = #tpu.pipeline_mode<synchronous>, transform_indices = @transform_1, window_bounds = array<i64: 11, 1024>}, {pipeline_mode = #tpu.pipeline_mode<synchronous>, transform_indices = @transform_2, window_bounds = array<i64: 1, 1024>}, {pipeline_mode = #tpu.pipeline_mode<synchronous>, transform_indices = @transform_3, window_bounds = array<i64: 1024, 128>}, {pipeline_mode = #tpu.pipeline_mode<synchronous>, transform_indices = @transform_4, window_bounds = array<i64: 1, 128>}, {transform_indices = @transform_5, window_bounds = array<i64: 8, 128>}]} {
    %c0 = arith.constant 0 : index
    %c0_0 = arith.constant 0 : index
    %0 = vector.load %arg1[%c0, %c0_0] : memref<8x11xbf16, #tpu.memory_space<vmem>>, vector<8x11xbf16>
    %c0_1 = arith.constant 0 : index
    %c0_2 = arith.constant 0 : index
    %1 = vector.load %arg2[%c0_1, %c0_2] : memref<11x1024xbf16, #tpu.memory_space<vmem>>, vector<11x1024xbf16>
    %cst = arith.constant dense<0.000000e+00> : vector<8x1024xf32>
    %2 = tpu.matmul %0, %1, %cst {dimension_numbers = #tpu.dot_dimension_numbers<[1], [0], [0], [1], [0, 0, 1, 1], [], []>} : vector<8x11xbf16>, vector<11x1024xbf16>, vector<8x1024xf32> -> vector<8x1024xf32>
    %c0_3 = arith.constant 0 : index
    %c0_4 = arith.constant 0 : index
    %3 = vector.load %arg3[%c0_3, %c0_4] : memref<1x1024xf32, #tpu.memory_space<vmem>>, vector<1x1024xf32>
    %4 = vector.broadcast %3 : vector<1x1024xf32> to vector<8x1024xf32>
    %5 = arith.addf %2, %4 : vector<8x1024xf32>
    %cst_5 = arith.constant 0.000000e+00 : f32
    %6 = vector.broadcast %cst_5 : f32 to vector<8x1024xf32>
    %7 = arith.maximumf %5, %6 : vector<8x1024xf32>
    %8 = arith.truncf %7 : vector<8x1024xf32> to vector<8x1024xbf16>
    %c0_6 = arith.constant 0 : index
    %c0_7 = arith.constant 0 : index
    %9 = vector.load %arg4[%c0_6, %c0_7] : memref<1024x128xbf16, #tpu.memory_space<vmem>>, vector<1024x128xbf16>
    %cst_8 = arith.constant dense<0.000000e+00> : vector<8x128xf32>
    %10 = tpu.matmul %8, %9, %cst_8 {dimension_numbers = #tpu.dot_dimension_numbers<[1], [0], [0], [1], [0, 0, 1, 1], [], []>} : vector<8x1024xbf16>, vector<1024x128xbf16>, vector<8x128xf32> -> vector<8x128xf32>
    %c0_9 = arith.constant 0 : index
    %c0_10 = arith.constant 0 : index
    %11 = vector.load %arg5[%c0_9, %c0_10] : memref<1x128xf32, #tpu.memory_space<vmem>>, vector<1x128xf32>
    %12 = vector.broadcast %11 : vector<1x128xf32> to vector<8x128xf32>
    %13 = arith.addf %10, %12 : vector<8x128xf32>
    %c0_11 = arith.constant 0 : index
    %c0_12 = arith.constant 0 : index
    %14 = vector.load %arg6[%c0_11, %c0_12] : memref<8x128xf32, #tpu.memory_space<vmem>>, vector<8x128xf32>
    tpu.vector_store %arg6[%c0_11, %c0_12], %13 {strides = array<i32>} : memref<8x128xf32, #tpu.memory_space<vmem>>, vector<8x128xf32>,
    return
  }
  func.func @transform_0(%arg0: i32) -> (i32, i32) {
    %c0_i32 = arith.constant 0 : i32
    %c0_i32_0 = arith.constant 0 : i32
    return %arg0, %c0_i32 : i32, i32
  }
  func.func @transform_1(%arg0: i32) -> (i32, i32) {
    %c0_i32 = arith.constant 0 : i32
    %c0_i32_0 = arith.constant 0 : i32
    %c0_i32_1 = arith.constant 0 : i32
    return %c0_i32, %c0_i32_0 : i32, i32
  }
  func.func @transform_2(%arg0: i32) -> (i32, i32) {
    %c0_i32 = arith.constant 0 : i32
    %c0_i32_0 = arith.constant 0 : i32
    %c0_i32_1 = arith.constant 0 : i32
    return %c0_i32, %c0_i32_0 : i32, i32
  }
  func.func @transform_3(%arg0: i32) -> (i32, i32) {
    %c0_i32 = arith.constant 0 : i32
    %c0_i32_0 = arith.constant 0 : i32
    %c0_i32_1 = arith.constant 0 : i32
    return %c0_i32, %c0_i32_0 : i32, i32
  }
  func.func @transform_4(%arg0: i32) -> (i32, i32) {
    %c0_i32 = arith.constant 0 : i32
    %c0_i32_0 = arith.constant 0 : i32
    %c0_i32_1 = arith.constant 0 : i32
    return %c0_i32, %c0_i32_0 : i32, i32
  }
  func.func @transform_5(%arg0: i32) -> (i32, i32) {
    %c0_i32 = arith.constant 0 : i32
    %c0_i32_0 = arith.constant 0 : i32
    return %arg0, %c0_i32 : i32, i32
  }
}

</mosaic_0001>

<llo_original>
// kernel: deep_q_forward.1
$region0: #{deep_q_forward.1}
  #allocation0 [shape = 'u32[]', space=smem, size = 0x4, offset = 0x4, fixed_abs, tag = 'smem constant byte address 0x4 - core index']
  #allocation1 [shape = 'u32[144,128]{1,0:T(1,128)}', space=vmem, size = 0x12000, scoped, tag = 'internal scratch']
  %s0 = inlined_call_operand.vmem [shape: bf16[8,11], index: 0, kind: input, shape index: {}]
  %s1 = inlined_call_operand.vmem [shape: bf16[11,1024], index: 1, kind: input, shape index: {}]
  %s2 = inlined_call_operand.vmem [shape: f32[1,1024], index: 2, kind: input, shape index: {}]
  %s3 = inlined_call_operand.vmem [shape: bf16[1024,128], index: 3, kind: input, shape index: {}]
  %s4 = inlined_call_operand.vmem [shape: f32[1,128], index: 4, kind: input, shape index: {}]
  %s5 = inlined_call_operand.vmem [shape: f32[8,128], index: 5, kind: output, shape index: {}]
  %s6 = sld [smem:[#allocation0]]
  $region30: #{deep_q_forward.1} parent=0
    _
  %s8 = ssub.s32 1, %s6
  %s9 = scalar_select 0, %s8, %s6
  // Predicated region
  $region2: #{deep_q_forward.1} parent=0 // pred_check
    _
  $region3: #{deep_q_forward.1} parent=0 // pred_check_branch
    %11 = sbr.rel (0) target = $region5
  $region4: #{deep_q_forward.1} parent=0 // pred_region
    _
  $region5: #{deep_q_forward.1} parent=0 // pred_fallthru
    _
  // Predicated region
  $region6: #{deep_q_forward.1} parent=0 // pred_check
    _
  $region7: #{deep_q_forward.1} parent=0 // pred_check_branch
    %13 = sbr.rel (0) target = $region9
  $region8: #{deep_q_forward.1} parent=0 // pred_region
    _
  $region9: #{deep_q_forward.1} parent=0 // pred_fallthru
    _
  // Predicated region
  $region10: #{deep_q_forward.1} parent=0 // pred_check
    _
  $region11: #{deep_q_forward.1} parent=0 // pred_check_branch
    %15 = sbr.rel (0) target = $region13
  $region12: #{deep_q_forward.1} parent=0 // pred_region
    _
  $region13: #{deep_q_forward.1} parent=0 // pred_fallthru
    _
  // Predicated region
  $region14: #{deep_q_forward.1} parent=0 // pred_check
    _
  $region15: #{deep_q_forward.1} parent=0 // pred_check_branch
    %17 = sbr.rel (0) target = $region17
  $region16: #{deep_q_forward.1} parent=0 // pred_region
    _
  $region17: #{deep_q_forward.1} parent=0 // pred_fallthru
    _
  // Predicated region
  $region18: #{deep_q_forward.1} parent=0 // pred_check
    _
  $region19: #{deep_q_forward.1} parent=0 // pred_check_branch
    %19 = sbr.rel (0) target = $region21
  $region20: #{deep_q_forward.1} parent=0 // pred_region
    _
  $region21: #{deep_q_forward.1} parent=0 // pred_fallthru
    _
  %v21 = vld [vmem:[%s0] sm:$0xf]
  %v22 = vld [vmem:[%s1] sm:$0xff]
  %v23 = vld [vmem:[%s1 + $0x8] sm:$0xff]
  %v24 = vld [vmem:[%s1 + $0x10] sm:$0xff]
  %v25 = vld [vmem:[%s1 + $0x18] sm:$0xff]
  %v26 = vld [vmem:[%s1 + $0x20] sm:$0x33]
  %v27 = vld [vmem:[%s1 + $0x28] sm:$0x33]
  %v28 = vld [vmem:[%s1 + $0x30] sm:$0x33]
  %v29 = vld [vmem:[%s1 + $0x38] sm:$0x33]
  %v30 = vld [vmem:[%s2] sm:$0xff]
  %v32 = vlaneseq
  %v33 = vshrl.u32 %v32, 7
  %v34 = vsub.s32 0, %v33
  %v35 = vrot.slane %v30, %v34
  %v36 = vlaneseq
  %v37 = vshrl.u32 %v36, 7
  %v38 = vsub.s32 1, %v37
  %v39 = vrot.slane %v30, %v38
  %v40 = vlaneseq
  %v41 = vshrl.u32 %v40, 7
  %v42 = vsub.s32 2, %v41
  %v43 = vrot.slane %v30, %v42
  %v44 = vlaneseq
  %v45 = vshrl.u32 %v44, 7
  %v46 = vsub.s32 3, %v45
  %v47 = vrot.slane %v30, %v46
  %v48 = vlaneseq
  %v49 = vshrl.u32 %v48, 7
  %v50 = vsub.s32 4, %v49
  %v51 = vrot.slane %v30, %v50
  %v52 = vlaneseq
  %v53 = vshrl.u32 %v52, 7
  %v54 = vsub.s32 5, %v53
  %v55 = vrot.slane %v30, %v54
  %v56 = vlaneseq
  %v57 = vshrl.u32 %v56, 7
  %v58 = vsub.s32 6, %v57
  %v59 = vrot.slane %v30, %v58
  %v60 = vlaneseq
  %v61 = vshrl.u32 %v60, 7
  %v62 = vsub.s32 7, %v61
  %v63 = vrot.slane %v30, %v62
  %v80 = vunpack.c.l.b16 %v22
  %v81 = vunpack.c.h.b16 %v22
  %v82 = vunpack.c.l.b16 %v23
  %v83 = vunpack.c.h.b16 %v23
  %v84 = vunpack.c.l.b16 %v24
  %v85 = vunpack.c.h.b16 %v24
  %v86 = vunpack.c.l.b16 %v25
  %v87 = vunpack.c.h.b16 %v25
  %v88 = vunpack.c.l.b16 %v26
  %v89 = vunpack.c.h.b16 %v26
  %v90 = vunpack.c.l.b16 %v27
  %v91 = vunpack.c.h.b16 %v27
  %v92 = vunpack.c.l.b16 %v28
  %v93 = vunpack.c.h.b16 %v28
  %v94 = vunpack.c.l.b16 %v29
  %v95 = vunpack.c.h.b16 %v29
  %v96 = vpack.c.b16 %v88, %v80
  %v97 = vpack.c.b16 %v89, %v81
  %v98 = vpack.c.b16 %v90, %v82
  %v99 = vpack.c.b16 %v91, %v83
  %v100 = vpack.c.b16 %v92, %v84
  %v101 = vpack.c.b16 %v93, %v85
  %v102 = vpack.c.b16 %v94, %v86
  %v103 = vpack.c.b16 %v95, %v87
  %vm104 = vcmask 89088
  %v106 = vsel %vm104, %v21, 0
  %vm108 = vcmask 1044480
  %vm109 = vcmask 1045504
  %v110 = vsel %vm108, 4294967295, 65535
  %v111 = vsel %vm109, %v110, 0
  %v113 = vand.u32 %v96, %v111
  %v116 = vand.u32 %v97, %v111
  %v119 = vand.u32 %v98, %v111
  %v122 = vand.u32 %v99, %v111
  %v125 = vand.u32 %v100, %v111
  %v128 = vand.u32 %v101, %v111
  %v131 = vand.u32 %v102, %v111
  %v134 = vand.u32 %v103, %v111
  %136 = vmatprep.subr.bf16.mxu0 %v116
  %137 = vmatpush1.bf16.msra.mxu0 %v113
  %138 = vmatprep.subr.bf16.mxu0 0
  %139 = vmatpush1.bf16.msra.mxu0 0
  %140 = vmatprep.subr.bf16.mxu0 0
  %141 = vmatpush1.bf16.msra.mxu0 0
  %142 = vmatprep.subr.bf16.mxu0 0
  %143 = vmatpush1.bf16.msra.mxu0 0
  %144 = vmatprep.subr.bf16.mxu0 0
  %145 = vmatpush1.bf16.msra.mxu0 0
  %146 = vmatprep.subr.bf16.mxu0 0
  %147 = vmatpush1.bf16.msra.mxu0 0
  %148 = vmatprep.subr.bf16.mxu0 0
  %149 = vmatpush1.bf16.msra.mxu0 0
  %150 = vmatprep.subr.bf16.mxu0 0
  %151 = vmatpush1.bf16.msra.mxu0 0
  %152 = vmatprep.subr.bf16.mxu0 0
  %153 = vmatpush1.bf16.msra.mxu0 0
  %154 = vmatprep.subr.bf16.mxu0 0
  %155 = vmatpush1.bf16.msra.mxu0 0
  %156 = vmatprep.subr.bf16.mxu0 0
  %157 = vmatpush1.bf16.msra.mxu0 0
  %158 = vmatprep.subr.bf16.mxu0 0
  %159 = vmatpush1.bf16.msra.mxu0 0
  %160 = vmatprep.subr.bf16.mxu0 0
  %161 = vmatpush1.bf16.msra.mxu0 0
  %162 = vmatprep.subr.bf16.mxu0 0
  %163 = vmatpush1.bf16.msra.mxu0 0
  %164 = vmatprep.subr.bf16.mxu0 0
  %165 = vmatpush1.bf16.msra.mxu0 0
  %166 = vmatprep.subr.bf16.mxu0 0
  %167 = vmatpush1.bf16.msra.mxu0 0
  %168 = vmatprep.mubr.bf16.mxu0 0
  %169 = vmatmul.mubr.bf16.gmra.mrb[0].mxu0 %v106
  %v170 = vpop.f32.mrb[0].mxu0
  %v171 = vadd.f32 %v35, %v170
  %v172 = vpop.f32.mrb[0].mxu0
  %v173 = vadd.f32 %v39, %v172
  %v174 = vpop.f32.mrb[0].mxu0
  %v175 = vpop.f32.mrb[0].mxu0
  %176 = vdwg.mxu0
  %177 = vmatprep.subr.bf16.mxu0 %v122
  %178 = vmatpush1.bf16.msra.mxu0 %v119
  %179 = vmatprep.subr.bf16.mxu0 0
  %180 = vmatpush1.bf16.msra.mxu0 0
  %181 = vmatprep.subr.bf16.mxu0 0
  %182 = vmatpush1.bf16.msra.mxu0 0
  %183 = vmatprep.subr.bf16.mxu0 0
  %184 = vmatpush1.bf16.msra.mxu0 0
  %185 = vmatprep.subr.bf16.mxu0 0
  %186 = vmatpush1.bf16.msra.mxu0 0
  %187 = vmatprep.subr.bf16.mxu0 0
  %188 = vmatpush1.bf16.msra.mxu0 0
  %189 = vmatprep.subr.bf16.mxu0 0
  %190 = vmatpush1.bf16.msra.mxu0 0
  %191 = vmatprep.subr.bf16.mxu0 0
  %192 = vmatpush1.bf16.msra.mxu0 0
  %193 = vmatprep.subr.bf16.mxu0 0
  %194 = vmatpush1.bf16.msra.mxu0 0
  %195 = vmatprep.subr.bf16.mxu0 0
  %196 = vmatpush1.bf16.msra.mxu0 0
  %197 = vmatprep.subr.bf16.mxu0 0
  %198 = vmatpush1.bf16.msra.mxu0 0
  %199 = vmatprep.subr.bf16.mxu0 0
  %200 = vmatpush1.bf16.msra.mxu0 0
  %201 = vmatprep.subr.bf16.mxu0 0
  %202 = vmatpush1.bf16.msra.mxu0 0
  %203 = vmatprep.subr.bf16.mxu0 0
  %204 = vmatpush1.bf16.msra.mxu0 0
  %205 = vmatprep.subr.bf16.mxu0 0
  %206 = vmatpush1.bf16.msra.mxu0 0
  %207 = vmatprep.subr.bf16.mxu0 0
  %208 = vmatpush1.bf16.msra.mxu0 0
  %209 = vmatprep.mubr.bf16.mxu0 0
  %210 = vmatmul.mubr.bf16.gmra.mrb[0].mxu0 %v106
  %v211 = vpop.f32.mrb[0].mxu0
  %v212 = vadd.f32 %v43, %v211
  %v213 = vpop.f32.mrb[0].mxu0
  %v214 = vadd.f32 %v47, %v213
  %v215 = vpop.f32.mrb[0].mxu0
  %v216 = vpop.f32.mrb[0].mxu0
  %217 = vdwg.mxu0
  %218 = vmatprep.subr.bf16.mxu0 %v128
  %219 = vmatpush1.bf16.msra.mxu0 %v125
  %220 = vmatprep.subr.bf16.mxu0 0
  %221 = vmatpush1.bf16.msra.mxu0 0
  %222 = vmatprep.subr.bf16.mxu0 0
  %223 = vmatpush1.bf16.msra.mxu0 0
  %224 = vmatprep.subr.bf16.mxu0 0
  %225 = vmatpush1.bf16.msra.mxu0 0
  %226 = vmatprep.subr.bf16.mxu0 0
  %227 = vmatpush1.bf16.msra.mxu0 0
  %228 = vmatprep.subr.bf16.mxu0 0
  %229 = vmatpush1.bf16.msra.mxu0 0
  %230 = vmatprep.subr.bf16.mxu0 0
  %231 = vmatpush1.bf16.msra.mxu0 0
  %232 = vmatprep.subr.bf16.mxu0 0
  %233 = vmatpush1.bf16.msra.mxu0 0
  %234 = vmatprep.subr.bf16.mxu0 0
  %235 = vmatpush1.bf16.msra.mxu0 0
  %236 = vmatprep.subr.bf16.mxu0 0
  %237 = vmatpush1.bf16.msra.mxu0 0
  %238 = vmatprep.subr.bf16.mxu0 0
  %239 = vmatpush1.bf16.msra.mxu0 0
  %240 = vmatprep.subr.bf16.mxu0 0
  %241 = vmatpush1.bf16.msra.mxu0 0
  %242 = vmatprep.subr.bf16.mxu0 0
  %243 = vmatpush1.bf16.msra.mxu0 0
  %244 = vmatprep.subr.bf16.mxu0 0
  %245 = vmatpush1.bf16.msra.mxu0 0
  %246 = vmatprep.subr.bf16.mxu0 0
  %247 = vmatpush1.bf16.msra.mxu0 0
  %248 = vmatprep.subr.bf16.mxu0 0
  %249 = vmatpush1.bf16.msra.mxu0 0
  %250 = vmatprep.mubr.bf16.mxu0 0
  %251 = vmatmul.mubr.bf16.gmra.mrb[0].mxu0 %v106
  %v252 = vpop.f32.mrb[0].mxu0
  %v253 = vadd.f32 %v51, %v252
  %v254 = vpop.f32.mrb[0].mxu0
  %v255 = vadd.f32 %v55, %v254
  %v256 = vpop.f32.mrb[0].mxu0
  %v257 = vpop.f32.mrb[0].mxu0
  %258 = vdwg.mxu0
  %259 = vmatprep.subr.bf16.mxu0 %v134
  %260 = vmatpush1.bf16.msra.mxu0 %v131
  %261 = vmatprep.subr.bf16.mxu0 0
  %262 = vmatpush1.bf16.msra.mxu0 0
  %263 = vmatprep.subr.bf16.mxu0 0
  %264 = vmatpush1.bf16.msra.mxu0 0
  %265 = vmatprep.subr.bf16.mxu0 0
  %266 = vmatpush1.bf16.msra.mxu0 0
  %267 = vmatprep.subr.bf16.mxu0 0
  %268 = vmatpush1.bf16.msra.mxu0 0
  %269 = vmatprep.subr.bf16.mxu0 0
  %270 = vmatpush1.bf16.msra.mxu0 0
  %271 = vmatprep.subr.bf16.mxu0 0
  %272 = vmatpush1.bf16.msra.mxu0 0
  %273 = vmatprep.subr.bf16.mxu0 0
  %274 = vmatpush1.bf16.msra.mxu0 0
  %275 = vmatprep.subr.bf16.mxu0 0
  %276 = vmatpush1.bf16.msra.mxu0 0
  %277 = vmatprep.subr.bf16.mxu0 0
  %278 = vmatpush1.bf16.msra.mxu0 0
  %279 = vmatprep.subr.bf16.mxu0 0
  %280 = vmatpush1.bf16.msra.mxu0 0
  %281 = vmatprep.subr.bf16.mxu0 0
  %282 = vmatpush1.bf16.msra.mxu0 0
  %283 = vmatprep.subr.bf16.mxu0 0
  %284 = vmatpush1.bf16.msra.mxu0 0
  %285 = vmatprep.subr.bf16.mxu0 0
  %286 = vmatpush1.bf16.msra.mxu0 0
  %287 = vmatprep.subr.bf16.mxu0 0
  %288 = vmatpush1.bf16.msra.mxu0 0
  %289 = vmatprep.subr.bf16.mxu0 0
  %290 = vmatpush1.bf16.msra.mxu0 0
  %291 = vmatprep.mubr.bf16.mxu0 0
  %292 = vmatmul.mubr.bf16.gmra.mrb[0].mxu0 %v106
  %v293 = vpop.f32.mrb[0].mxu0
  %v294 = vadd.f32 %v59, %v293
  %v295 = vpop.f32.mrb[0].mxu0
  %v296 = vadd.f32 %v63, %v295
  %v297 = vpop.f32.mrb[0].mxu0
  %v298 = vpop.f32.mrb[0].mxu0
  %299 = vdwg.mxu0
  %v300 = vmax.f32 %v171, 0.0
  %v301 = vmax.f32 %v173, 0.0
  %v302 = vmax.f32 %v212, 0.0
  %v303 = vmax.f32 %v214, 0.0
  %v304 = vmax.f32 %v253, 0.0
  %v305 = vmax.f32 %v255, 0.0
  %v306 = vmax.f32 %v294, 0.0
  %v307 = vmax.f32 %v296, 0.0
  %v308 = vpack.c.bf16 %v300, %v300
  %v309 = vpack.c.bf16 %v301, %v301
  %v310 = vpack.c.bf16 %v302, %v302
  %v311 = vpack.c.bf16 %v303, %v303
  %v312 = vpack.c.bf16 %v304, %v304
  %v313 = vpack.c.bf16 %v305, %v305
  %v314 = vpack.c.bf16 %v306, %v306
  %v315 = vpack.c.bf16 %v307, %v307
  %v316 = vld [vmem:[%s3] sm:$0xf]
  %v317 = vld [vmem:[%s3 + $0x4] sm:$0xf]
  %v318 = vld [vmem:[%s3 + $0x8] sm:$0xf]
  %v319 = vld [vmem:[%s3 + $0xc] sm:$0xf]
  %v320 = vld [vmem:[%s3 + $0x10] sm:$0xf]
  %v321 = vld [vmem:[%s3 + $0x14] sm:$0xf]
  %v322 = vld [vmem:[%s3 + $0x18] sm:$0xf]
  %v323 = vld [vmem:[%s3 + $0x1c] sm:$0xf]
  %v324 = vld [vmem:[%s3 + $0x20] sm:$0xf]
  %v325 = vld [vmem:[%s3 + $0x24] sm:$0xf]
  %v326 = vld [vmem:[%s3 + $0x28] sm:$0xf]
  %v327 = vld [vmem:[%s3 + $0x2c] sm:$0xf]
  %v328 = vld [vmem:[%s3 + $0x30] sm:$0xf]
  %v329 = vld [vmem:[%s3 + $0x34] sm:$0xf]
  %v330 = vld [vmem:[%s3 + $0x38] sm:$0xf]
  %v331 = vld [vmem:[%s3 + $0x3c] sm:$0xf]
  %v332 = vld [vmem:[%s3 + $0x40] sm:$0xf]
  %v333 = vld [vmem:[%s3 + $0x44] sm:$0xf]
  %v334 = vld [vmem:[%s3 + $0x48] sm:$0xf]
  %v335 = vld [vmem:[%s3 + $0x4c] sm:$0xf]
  %v336 = vld [vmem:[%s3 + $0x50] sm:$0xf]
  %v337 = vld [vmem:[%s3 + $0x54] sm:$0xf]
  %v338 = vld [vmem:[%s3 + $0x58] sm:$0xf]
  %v339 = vld [vmem:[%s3 + $0x5c] sm:$0xf]
  %v340 = vld [vmem:[%s3 + $0x60] sm:$0xf]
  %v341 = vld [vmem:[%s3 + $0x64] sm:$0xf]
  %v342 = vld [vmem:[%s3 + $0x68] sm:$0xf]
  %v343 = vld [vmem:[%s3 + $0x6c] sm:$0xf]
  %v344 = vld [vmem:[%s3 + $0x70] sm:$0xf]
  %v345 = vld [vmem:[%s3 + $0x74] sm:$0xf]
  %v346 = vld [vmem:[%s3 + $0x78] sm:$0xf]
  %v347 = vld [vmem:[%s3 + $0x7c] sm:$0xf]
  %v348 = vld [vmem:[%s3 + $0x80] sm:$0xf]
  %v349 = vld [vmem:[%s3 + $0x84] sm:$0xf]
  %v350 = vld [vmem:[%s3 + $0x88] sm:$0xf]
  %v351 = vld [vmem:[%s3 + $0x8c] sm:$0xf]
  %v352 = vld [vmem:[%s3 + $0x90] sm:$0xf]
  %v353 = vld [vmem:[%s3 + $0x94] sm:$0xf]
  %v354 = vld [vmem:[%s3 + $0x98] sm:$0xf]
  %v355 = vld [vmem:[%s3 + $0x9c] sm:$0xf]
  %v356 = vld [vmem:[%s3 + $0xa0] sm:$0xf]
  %v357 = vld [vmem:[%s3 + $0xa4] sm:$0xf]
  %v358 = vld [vmem:[%s3 + $0xa8] sm:$0xf]
  %v359 = vld [vmem:[%s3 + $0xac] sm:$0xf]
  %v360 = vld [vmem:[%s3 + $0xb0] sm:$0xf]
  %v361 = vld [vmem:[%s3 + $0xb4] sm:$0xf]
  %v362 = vld [vmem:[%s3 + $0xb8] sm:$0xf]
  %v363 = vld [vmem:[%s3 + $0xbc] sm:$0xf]
  %v364 = vld [vmem:[%s3 + $0xc0] sm:$0xf]
  %v365 = vld [vmem:[%s3 + $0xc4] sm:$0xf]
  %v366 = vld [vmem:[%s3 + $0xc8] sm:$0xf]
  %v367 = vld [vmem:[%s3 + $0xcc] sm:$0xf]
  %v368 = vld [vmem:[%s3 + $0xd0] sm:$0xf]
  %v369 = vld [vmem:[%s3 + $0xd4] sm:$0xf]
  %v370 = vld [vmem:[%s3 + $0xd8] sm:$0xf]
  %v371 = vld [vmem:[%s3 + $0xdc] sm:$0xf]
  %v372 = vld [vmem:[%s3 + $0xe0] sm:$0xf]
  %v373 = vld [vmem:[%s3 + $0xe4] sm:$0xf]
  %v374 = vld [vmem:[%s3 + $0xe8] sm:$0xf]
  %v375 = vld [vmem:[%s3 + $0xec] sm:$0xf]
  %v376 = vld [vmem:[%s3 + $0xf0] sm:$0xf]
  %v377 = vld [vmem:[%s3 + $0xf4] sm:$0xf]
  %v378 = vld [vmem:[%s3 + $0xf8] sm:$0xf]
  %v379 = vld [vmem:[%s3 + $0xfc] sm:$0xf]
  %v380 = vld [vmem:[%s3 + $0x100] sm:$0xf]
  %v381 = vld [vmem:[%s3 + $0x104] sm:$0xf]
  %v382 = vld [vmem:[%s3 + $0x108] sm:$0xf]
  %v383 = vld [vmem:[%s3 + $0x10c] sm:$0xf]
  %v384 = vld [vmem:[%s3 + $0x110] sm:$0xf]
  %v385 = vld [vmem:[%s3 + $0x114] sm:$0xf]
  %v386 = vld [vmem:[%s3 + $0x118] sm:$0xf]
  %v387 = vld [vmem:[%s3 + $0x11c] sm:$0xf]
  %v388 = vld [vmem:[%s3 + $0x120] sm:$0xf]
  %v389 = vld [vmem:[%s3 + $0x124] sm:$0xf]
  %v390 = vld [vmem:[%s3 + $0x128] sm:$0xf]
  %v391 = vld [vmem:[%s3 + $0x12c] sm:$0xf]
  %v392 = vld [vmem:[%s3 + $0x130] sm:$0xf]
  %v393 = vld [vmem:[%s3 + $0x134] sm:$0xf]
  %v394 = vld [vmem:[%s3 + $0x138] sm:$0xf]
  %v395 = vld [vmem:[%s3 + $0x13c] sm:$0xf]
  %v396 = vld [vmem:[%s3 + $0x140] sm:$0xf]
  %v397 = vld [vmem:[%s3 + $0x144] sm:$0xf]
  %v398 = vld [vmem:[%s3 + $0x148] sm:$0xf]
  %v399 = vld [vmem:[%s3 + $0x14c] sm:$0xf]
  %v400 = vld [vmem:[%s3 + $0x150] sm:$0xf]
  %v401 = vld [vmem:[%s3 + $0x154] sm:$0xf]
  %v402 = vld [vmem:[%s3 + $0x158] sm:$0xf]
  %v403 = vld [vmem:[%s3 + $0x15c] sm:$0xf]
  %v404 = vld [vmem:[%s3 + $0x160] sm:$0xf]
  %v405 = vld [vmem:[%s3 + $0x164] sm:$0xf]
  %v406 = vld [vmem:[%s3 + $0x168] sm:$0xf]
  %v407 = vld [vmem:[%s3 + $0x16c] sm:$0xf]
  %v408 = vld [vmem:[%s3 + $0x170] sm:$0xf]
  %v409 = vld [vmem:[%s3 + $0x174] sm:$0xf]
  %v410 = vld [vmem:[%s3 + $0x178] sm:$0xf]
  %v411 = vld [vmem:[%s3 + $0x17c] sm:$0xf]
  %v412 = vld [vmem:[%s3 + $0x180] sm:$0xf]
  %v413 = vld [vmem:[%s3 + $0x184] sm:$0xf]
  %v414 = vld [vmem:[%s3 + $0x188] sm:$0xf]
  %v415 = vld [vmem:[%s3 + $0x18c] sm:$0xf]
  %v416 = vld [vmem:[%s3 + $0x190] sm:$0xf]
  %v417 = vld [vmem:[%s3 + $0x194] sm:$0xf]
  %v418 = vld [vmem:[%s3 + $0x198] sm:$0xf]
  %v419 = vld [vmem:[%s3 + $0x19c] sm:$0xf]
  %v420 = vld [vmem:[%s3 + $0x1a0] sm:$0xf]
  %v421 = vld [vmem:[%s3 + $0x1a4] sm:$0xf]
  %v422 = vld [vmem:[%s3 + $0x1a8] sm:$0xf]
  %v423 = vld [vmem:[%s3 + $0x1ac] sm:$0xf]
  %v424 = vld [vmem:[%s3 + $0x1b0] sm:$0xf]
  %v425 = vld [vmem:[%s3 + $0x1b4] sm:$0xf]
  %v426 = vld [vmem:[%s3 + $0x1b8] sm:$0xf]
  %v427 = vld [vmem:[%s3 + $0x1bc] sm:$0xf]
  %v428 = vld [vmem:[%s3 + $0x1c0] sm:$0xf]
  %v429 = vld [vmem:[%s3 + $0x1c4] sm:$0xf]
  %v430 = vld [vmem:[%s3 + $0x1c8] sm:$0xf]
  %v431 = vld [vmem:[%s3 + $0x1cc] sm:$0xf]
  %v432 = vld [vmem:[%s3 + $0x1d0] sm:$0xf]
  %v433 = vld [vmem:[%s3 + $0x1d4] sm:$0xf]
  %v434 = vld [vmem:[%s3 + $0x1d8] sm:$0xf]
  %v435 = vld [vmem:[%s3 + $0x1dc] sm:$0xf]
  %v436 = vld [vmem:[%s3 + $0x1e0] sm:$0xf]
  %v437 = vld [vmem:[%s3 + $0x1e4] sm:$0xf]
  %v438 = vld [vmem:[%s3 + $0x1e8] sm:$0xf]
  %v439 = vld [vmem:[%s3 + $0x1ec] sm:$0xf]
  %v440 = vld [vmem:[%s3 + $0x1f0] sm:$0xf]
  %v441 = vld [vmem:[%s3 + $0x1f4] sm:$0xf]
  %v442 = vld [vmem:[%s3 + $0x1f8] sm:$0xf]
  %v443 = vld [vmem:[%s3 + $0x1fc] sm:$0xf]
  %v444 = vld [vmem:[%s4] sm:$0x1]
  %v446 = vlaneseq
  %v447 = vshrl.u32 %v446, 7
  %v448 = vsub.s32 0, %v447
  %v449 = vrot.slane %v444, %v448
  %v579 = vunpack.c.l.b16 %v316
  %v580 = vunpack.c.l.b16 %v317
  %v581 = vunpack.c.l.b16 %v318
  %v582 = vunpack.c.l.b16 %v319
  %v583 = vunpack.c.l.b16 %v320
  %v584 = vunpack.c.l.b16 %v321
  %v585 = vunpack.c.l.b16 %v322
  %v586 = vunpack.c.l.b16 %v323
  %v587 = vunpack.c.l.b16 %v324
  %v588 = vunpack.c.l.b16 %v325
  %v589 = vunpack.c.l.b16 %v326
  %v590 = vunpack.c.l.b16 %v327
  %v591 = vunpack.c.l.b16 %v328
  %v592 = vunpack.c.l.b16 %v329
  %v593 = vunpack.c.l.b16 %v330
  %v594 = vunpack.c.l.b16 %v331
  %v595 = vunpack.c.l.b16 %v332
  %v596 = vunpack.c.l.b16 %v333
  %v597 = vunpack.c.l.b16 %v334
  %v598 = vunpack.c.l.b16 %v335
  %v599 = vunpack.c.l.b16 %v336
  %v600 = vunpack.c.l.b16 %v337
  %v601 = vunpack.c.l.b16 %v338
  %v602 = vunpack.c.l.b16 %v339
  %v603 = vunpack.c.l.b16 %v340
  %v604 = vunpack.c.l.b16 %v341
  %v605 = vunpack.c.l.b16 %v342
  %v606 = vunpack.c.l.b16 %v343
  %v607 = vunpack.c.l.b16 %v344
  %v608 = vunpack.c.l.b16 %v345
  %v609 = vunpack.c.l.b16 %v346
  %v610 = vunpack.c.l.b16 %v347
  %v611 = vunpack.c.l.b16 %v348
  %v612 = vunpack.c.l.b16 %v349
  %v613 = vunpack.c.l.b16 %v350
  %v614 = vunpack.c.l.b16 %v351
  %v615 = vunpack.c.l.b16 %v352
  %v616 = vunpack.c.l.b16 %v353
  %v617 = vunpack.c.l.b16 %v354
  %v618 = vunpack.c.l.b16 %v355
  %v619 = vunpack.c.l.b16 %v356
  %v620 = vunpack.c.l.b16 %v357
  %v621 = vunpack.c.l.b16 %v358
  %v622 = vunpack.c.l.b16 %v359
  %v623 = vunpack.c.l.b16 %v360
  %v624 = vunpack.c.l.b16 %v361
  %v625 = vunpack.c.l.b16 %v362
  %v626 = vunpack.c.l.b16 %v363
  %v627 = vunpack.c.l.b16 %v364
  %v628 = vunpack.c.l.b16 %v365
  %v629 = vunpack.c.l.b16 %v366
  %v630 = vunpack.c.l.b16 %v367
  %v631 = vunpack.c.l.b16 %v368
  %v632 = vunpack.c.l.b16 %v369
  %v633 = vunpack.c.l.b16 %v370
  %v634 = vunpack.c.l.b16 %v371
  %v635 = vunpack.c.l.b16 %v372
  %v636 = vunpack.c.l.b16 %v373
  %v637 = vunpack.c.l.b16 %v374
  %v638 = vunpack.c.l.b16 %v375
  %v639 = vunpack.c.l.b16 %v376
  %v640 = vunpack.c.l.b16 %v377
  %v641 = vunpack.c.l.b16 %v378
  %v642 = vunpack.c.l.b16 %v379
  %v643 = vunpack.c.l.b16 %v380
  %v644 = vunpack.c.l.b16 %v381
  %v645 = vunpack.c.l.b16 %v382
  %v646 = vunpack.c.l.b16 %v383
  %v647 = vunpack.c.l.b16 %v384
  %v648 = vunpack.c.l.b16 %v385
  %v649 = vunpack.c.l.b16 %v386
  %v650 = vunpack.c.l.b16 %v387
  %v651 = vunpack.c.l.b16 %v388
  %v652 = vunpack.c.l.b16 %v389
  %v653 = vunpack.c.l.b16 %v390
  %v654 = vunpack.c.l.b16 %v391
  %v655 = vunpack.c.l.b16 %v392
  %v656 = vunpack.c.l.b16 %v393
  %v657 = vunpack.c.l.b16 %v394
  %v658 = vunpack.c.l.b16 %v395
  %v659 = vunpack.c.l.b16 %v396
  %v660 = vunpack.c.l.b16 %v397
  %v661 = vunpack.c.l.b16 %v398
  %v662 = vunpack.c.l.b16 %v399
  %v663 = vunpack.c.l.b16 %v400
  %v664 = vunpack.c.l.b16 %v401
  %v665 = vunpack.c.l.b16 %v402
  %v666 = vunpack.c.l.b16 %v403
  %v667 = vunpack.c.l.b16 %v404
  %v668 = vunpack.c.l.b16 %v405
  %v669 = vunpack.c.l.b16 %v406
  %v670 = vunpack.c.l.b16 %v407
  %v671 = vunpack.c.l.b16 %v408
  %v672 = vunpack.c.l.b16 %v409
  %v673 = vunpack.c.l.b16 %v410
  %v674 = vunpack.c.l.b16 %v411
  %v675 = vunpack.c.l.b16 %v412
  %v676 = vunpack.c.l.b16 %v413
  %v677 = vunpack.c.l.b16 %v414
  %v678 = vunpack.c.l.b16 %v415
  %v679 = vunpack.c.l.b16 %v416
  %v680 = vunpack.c.l.b16 %v417
  %v681 = vunpack.c.l.b16 %v418
  %v682 = vunpack.c.l.b16 %v419
  %v683 = vunpack.c.l.b16 %v420
  %v684 = vunpack.c.l.b16 %v421
  %v685 = vunpack.c.l.b16 %v422
  %v686 = vunpack.c.l.b16 %v423
  %v687 = vunpack.c.l.b16 %v424
  %v688 = vunpack.c.l.b16 %v425
  %v689 = vunpack.c.l.b16 %v426
  %v690 = vunpack.c.l.b16 %v427
  %v691 = vunpack.c.l.b16 %v428
  %v692 = vunpack.c.l.b16 %v429
  %v693 = vunpack.c.l.b16 %v430
  %v694 = vunpack.c.l.b16 %v431
  %v695 = vunpack.c.l.b16 %v432
  %v696 = vunpack.c.l.b16 %v433
  %v697 = vunpack.c.l.b16 %v434
  %v698 = vunpack.c.l.b16 %v435
  %v699 = vunpack.c.l.b16 %v436
  %v700 = vunpack.c.l.b16 %v437
  %v701 = vunpack.c.l.b16 %v438
  %v702 = vunpack.c.l.b16 %v439
  %v703 = vunpack.c.l.b16 %v440
  %v704 = vunpack.c.l.b16 %v441
  %v705 = vunpack.c.l.b16 %v442
  %v706 = vunpack.c.l.b16 %v443
  %v707 = vpack.c.b16 %v580, %v579
  %v708 = vpack.c.b16 %v582, %v581
  %v709 = vpack.c.b16 %v584, %v583
  %v710 = vpack.c.b16 %v586, %v585
  %v711 = vpack.c.b16 %v588, %v587
  %v712 = vpack.c.b16 %v590, %v589
  %v713 = vpack.c.b16 %v592, %v591
  %v714 = vpack.c.b16 %v594, %v593
  %v715 = vpack.c.b16 %v596, %v595
  %v716 = vpack.c.b16 %v598, %v597
  %v717 = vpack.c.b16 %v600, %v599
  %v718 = vpack.c.b16 %v602, %v601
  %v719 = vpack.c.b16 %v604, %v603
  %v720 = vpack.c.b16 %v606, %v605
  %v721 = vpack.c.b16 %v608, %v607
  %v722 = vpack.c.b16 %v610, %v609
  %v723 = vpack.c.b16 %v612, %v611
  %v724 = vpack.c.b16 %v614, %v613
  %v725 = vpack.c.b16 %v616, %v615
  %v726 = vpack.c.b16 %v618, %v617
  %v727 = vpack.c.b16 %v620, %v619
  %v728 = vpack.c.b16 %v622, %v621
  %v729 = vpack.c.b16 %v624, %v623
  %v730 = vpack.c.b16 %v626, %v625
  %v731 = vpack.c.b16 %v628, %v627
  %v732 = vpack.c.b16 %v630, %v629
  %v733 = vpack.c.b16 %v632, %v631
  %v734 = vpack.c.b16 %v634, %v633
  %v735 = vpack.c.b16 %v636, %v635
  %v736 = vpack.c.b16 %v638, %v637
  %v737 = vpack.c.b16 %v640, %v639
  %v738 = vpack.c.b16 %v642, %v641
  %v739 = vpack.c.b16 %v644, %v643
  %v740 = vpack.c.b16 %v646, %v645
  %v741 = vpack.c.b16 %v648, %v647
  %v742 = vpack.c.b16 %v650, %v649
  %v743 = vpack.c.b16 %v652, %v651
  %v744 = vpack.c.b16 %v654, %v653
  %v745 = vpack.c.b16 %v656, %v655
  %v746 = vpack.c.b16 %v658, %v657
  %v747 = vpack.c.b16 %v660, %v659
  %v748 = vpack.c.b16 %v662, %v661
  %v749 = vpack.c.b16 %v664, %v663
  %v750 = vpack.c.b16 %v666, %v665
  %v751 = vpack.c.b16 %v668, %v667
  %v752 = vpack.c.b16 %v670, %v669
  %v753 = vpack.c.b16 %v672, %v671
  %v754 = vpack.c.b16 %v674, %v673
  %v755 = vpack.c.b16 %v676, %v675
  %v756 = vpack.c.b16 %v678, %v677
  %v757 = vpack.c.b16 %v680, %v679
  %v758 = vpack.c.b16 %v682, %v681
  %v759 = vpack.c.b16 %v684, %v683
  %v760 = vpack.c.b16 %v686, %v685
  %v761 = vpack.c.b16 %v688, %v687
  %v762 = vpack.c.b16 %v690, %v689
  %v763 = vpack.c.b16 %v692, %v691
  %v764 = vpack.c.b16 %v694, %v693
  %v765 = vpack.c.b16 %v696, %v695
  %v766 = vpack.c.b16 %v698, %v697
  %v767 = vpack.c.b16 %v700, %v699
  %v768 = vpack.c.b16 %v702, %v701
  %v769 = vpack.c.b16 %v704, %v703
  %v770 = vpack.c.b16 %v706, %v705
  %835 = vmatprep.subr.bf16.mxu0 0
  %836 = vmatpush1.bf16.msra.mxu0 %v707
  %837 = vmatprep.subr.bf16.mxu0 0
  %838 = vmatpush1.bf16.msra.mxu0 %v708
  %839 = vmatprep.subr.bf16.mxu0 0
  %840 = vmatpush1.bf16.msra.mxu0 %v709
  %841 = vmatprep.subr.bf16.mxu0 0
  %842 = vmatpush1.bf16.msra.mxu0 %v710
  %843 = vmatprep.subr.bf16.mxu0 0
  %844 = vmatpush1.bf16.msra.mxu0 %v711
  %845 = vmatprep.subr.bf16.mxu0 0
  %846 = vmatpush1.bf16.msra.mxu0 %v712
  %847 = vmatprep.subr.bf16.mxu0 0
  %848 = vmatpush1.bf16.msra.mxu0 %v713
  %849 = vmatprep.subr.bf16.mxu0 0
  %850 = vmatpush1.bf16.msra.mxu0 %v714
  %851 = vmatprep.subr.bf16.mxu0 0
  %852 = vmatpush1.bf16.msra.mxu0 %v715
  %853 = vmatprep.subr.bf16.mxu0 0
  %854 = vmatpush1.bf16.msra.mxu0 %v716
  %855 = vmatprep.subr.bf16.mxu0 0
  %856 = vmatpush1.bf16.msra.mxu0 %v717
  %857 = vmatprep.subr.bf16.mxu0 0
  %858 = vmatpush1.bf16.msra.mxu0 %v718
  %859 = vmatprep.subr.bf16.mxu0 0
  %860 = vmatpush1.bf16.msra.mxu0 %v719
  %861 = vmatprep.subr.bf16.mxu0 0
  %862 = vmatpush1.bf16.msra.mxu0 %v720
  %863 = vmatprep.subr.bf16.mxu0 0
  %864 = vmatpush1.bf16.msra.mxu0 %v721
  %865 = vmatprep.subr.bf16.mxu0 0
  %866 = vmatpush1.bf16.msra.mxu0 %v722
  %867 = vmatprep.mubr.bf16.mxu0 %v309
  %868 = vmatmul.mubr.bf16.gmra.mrb[0].mxu0 %v308
  %v869 = vpop.f32.mrb[0].mxu0
  %v870 = vadd.f32 %v449, %v869
  %v871 = vpop.f32.mrb[0].mxu0
  %v872 = vpop.f32.mrb[0].mxu0
  %v873 = vpop.f32.mrb[0].mxu0
  %874 = vdwg.mxu0
  %875 = vmatprep.subr.bf16.mxu0 0
  %876 = vmatpush1.bf16.msra.mxu0 %v723
  %877 = vmatprep.subr.bf16.mxu0 0
  %878 = vmatpush1.bf16.msra.mxu0 %v724
  %879 = vmatprep.subr.bf16.mxu0 0
  %880 = vmatpush1.bf16.msra.mxu0 %v725
  %881 = vmatprep.subr.bf16.mxu0 0
  %882 = vmatpush1.bf16.msra.mxu0 %v726
  %883 = vmatprep.subr.bf16.mxu0 0
  %884 = vmatpush1.bf16.msra.mxu0 %v727
  %885 = vmatprep.subr.bf16.mxu0 0
  %886 = vmatpush1.bf16.msra.mxu0 %v728
  %887 = vmatprep.subr.bf16.mxu0 0
  %888 = vmatpush1.bf16.msra.mxu0 %v729
  %889 = vmatprep.subr.bf16.mxu0 0
  %890 = vmatpush1.bf16.msra.mxu0 %v730
  %891 = vmatprep.subr.bf16.mxu0 0
  %892 = vmatpush1.bf16.msra.mxu0 %v731
  %893 = vmatprep.subr.bf16.mxu0 0
  %894 = vmatpush1.bf16.msra.mxu0 %v732
  %895 = vmatprep.subr.bf16.mxu0 0
  %896 = vmatpush1.bf16.msra.mxu0 %v733
  %897 = vmatprep.subr.bf16.mxu0 0
  %898 = vmatpush1.bf16.msra.mxu0 %v734
  %899 = vmatprep.subr.bf16.mxu0 0
  %900 = vmatpush1.bf16.msra.mxu0 %v735
  %901 = vmatprep.subr.bf16.mxu0 0
  %902 = vmatpush1.bf16.msra.mxu0 %v736
  %903 = vmatprep.subr.bf16.mxu0 0
  %904 = vmatpush1.bf16.msra.mxu0 %v737
  %905 = vmatprep.subr.bf16.mxu0 0
  %906 = vmatpush1.bf16.msra.mxu0 %v738
  %907 = vmatprep.mubr.bf16.mxu0 %v311
  %908 = vmatmul.mubr.bf16.gmra.mrb[0].mxu0 %v310
  %v909 = vpop.f32.mrb[0].mxu0
  %v910 = vadd.f32 %v870, %v909
  %v911 = vpop.f32.mrb[0].mxu0
  %v912 = vpop.f32.mrb[0].mxu0
  %v913 = vpop.f32.mrb[0].mxu0
  %914 = vdwg.mxu0
  %915 = vmatprep.subr.bf16.mxu0 0
  %916 = vmatpush1.bf16.msra.mxu0 %v739
  %917 = vmatprep.subr.bf16.mxu0 0
  %918 = vmatpush1.bf16.msra.mxu0 %v740
  %919 = vmatprep.subr.bf16.mxu0 0
  %920 = vmatpush1.bf16.msra.mxu0 %v741
  %921 = vmatprep.subr.bf16.mxu0 0
  %922 = vmatpush1.bf16.msra.mxu0 %v742
  %923 = vmatprep.subr.bf16.mxu0 0
  %924 = vmatpush1.bf16.msra.mxu0 %v743
  %925 = vmatprep.subr.bf16.mxu0 0
  %926 = vmatpush1.bf16.msra.mxu0 %v744
  %927 = vmatprep.subr.bf16.mxu0 0
  %928 = vmatpush1.bf16.msra.mxu0 %v745
  %929 = vmatprep.subr.bf16.mxu0 0
  %930 = vmatpush1.bf16.msra.mxu0 %v746
  %931 = vmatprep.subr.bf16.mxu0 0
  %932 = vmatpush1.bf16.msra.mxu0 %v747
  %933 = vmatprep.subr.bf16.mxu0 0
  %934 = vmatpush1.bf16.msra.mxu0 %v748
  %935 = vmatprep.subr.bf16.mxu0 0
  %936 = vmatpush1.bf16.msra.mxu0 %v749
  %937 = vmatprep.subr.bf16.mxu0 0
  %938 = vmatpush1.bf16.msra.mxu0 %v750
  %939 = vmatprep.subr.bf16.mxu0 0
  %940 = vmatpush1.bf16.msra.mxu0 %v751
  %941 = vmatprep.subr.bf16.mxu0 0
  %942 = vmatpush1.bf16.msra.mxu0 %v752
  %943 = vmatprep.subr.bf16.mxu0 0
  %944 = vmatpush1.bf16.msra.mxu0 %v753
  %945 = vmatprep.subr.bf16.mxu0 0
  %946 = vmatpush1.bf16.msra.mxu0 %v754
  %947 = vmatprep.mubr.bf16.mxu0 %v313
  %948 = vmatmul.mubr.bf16.gmra.mrb[0].mxu0 %v312
  %v949 = vpop.f32.mrb[0].mxu0
  %v950 = vadd.f32 %v910, %v949
  %v951 = vpop.f32.mrb[0].mxu0
  %v952 = vpop.f32.mrb[0].mxu0
  %v953 = vpop.f32.mrb[0].mxu0
  %954 = vdwg.mxu0
  %955 = vmatprep.subr.bf16.mxu0 0
  %956 = vmatpush1.bf16.msra.mxu0 %v755
  %957 = vmatprep.subr.bf16.mxu0 0
  %958 = vmatpush1.bf16.msra.mxu0 %v756
  %959 = vmatprep.subr.bf16.mxu0 0
  %960 = vmatpush1.bf16.msra.mxu0 %v757
  %961 = vmatprep.subr.bf16.mxu0 0
  %962 = vmatpush1.bf16.msra.mxu0 %v758
  %963 = vmatprep.subr.bf16.mxu0 0
  %964 = vmatpush1.bf16.msra.mxu0 %v759
  %965 = vmatprep.subr.bf16.mxu0 0
  %966 = vmatpush1.bf16.msra.mxu0 %v760
  %967 = vmatprep.subr.bf16.mxu0 0
  %968 = vmatpush1.bf16.msra.mxu0 %v761
  %969 = vmatprep.subr.bf16.mxu0 0
  %970 = vmatpush1.bf16.msra.mxu0 %v762
  %971 = vmatprep.subr.bf16.mxu0 0
  %972 = vmatpush1.bf16.msra.mxu0 %v763
  %973 = vmatprep.subr.bf16.mxu0 0
  %974 = vmatpush1.bf16.msra.mxu0 %v764
  %975 = vmatprep.subr.bf16.mxu0 0
  %976 = vmatpush1.bf16.msra.mxu0 %v765
  %977 = vmatprep.subr.bf16.mxu0 0
  %978 = vmatpush1.bf16.msra.mxu0 %v766
  %979 = vmatprep.subr.bf16.mxu0 0
  %980 = vmatpush1.bf16.msra.mxu0 %v767
  %981 = vmatprep.subr.bf16.mxu0 0
  %982 = vmatpush1.bf16.msra.mxu0 %v768
  %983 = vmatprep.subr.bf16.mxu0 0
  %984 = vmatpush1.bf16.msra.mxu0 %v769
  %985 = vmatprep.subr.bf16.mxu0 0
  %986 = vmatpush1.bf16.msra.mxu0 %v770
  %987 = vmatprep.mubr.bf16.mxu0 %v315
  %988 = vmatmul.mubr.bf16.gmra.mrb[0].mxu0 %v314
  %v989 = vpop.f32.mrb[0].mxu0
  %v990 = vadd.f32 %v950, %v989
  %v991 = vpop.f32.mrb[0].mxu0
  %v992 = vpop.f32.mrb[0].mxu0
  %v993 = vpop.f32.mrb[0].mxu0
  %994 = vdwg.mxu0
  %995 = vst [vmem:[%s5] sm:$0xff] %v990
  // Predicated region
  $region22: #{deep_q_forward.1} parent=0 // pred_check
    _
  $region23: #{deep_q_forward.1} parent=0 // pred_check_branch
    %997 = sbr.rel (0) target = $region25
  $region24: #{deep_q_forward.1} parent=0 // pred_region
    _
  $region25: #{deep_q_forward.1} parent=0 // pred_fallthru
    _
  // Predicated region
  $region26: #{deep_q_forward.1} parent=0 // pred_check
    _
  $region27: #{deep_q_forward.1} parent=0 // pred_check_branch
    %999 = sbr.rel (0) target = $region29
  $region28: #{deep_q_forward.1} parent=0 // pred_region
    _
  $region29: #{deep_q_forward.1} parent=0 // pred_fallthru
    _

</llo_original>
